<compile_context>
chip_gen: v7x
topology: tpu7x:2x2x1
jax: 0.10.0
libtpu: 0.0.40
codegen_flags: <defaults>
</compile_context>

<pallas_src>
import math
import functools

import jax
import jax.numpy as jnp
from jax.experimental import pallas as pl
from jax.experimental.pallas import tpu as pltpu


def _round_up(x, m):
    return ((x + m - 1) // m) * m


def _gcn_kernel(x_ref, adj_ref, w_ref, b_ref, o_ref, acc_ref):
    # x_ref:   (TILE, Fin)     node rows of the current k (reduction) tile
    # adj_ref: (TILE, TILE)    rows = output-node tile i, cols = k tile
    # w_ref:   (Fin,  Fp)      Fout padded to a multiple of 128 (lane-dense)
    # b_ref:   (1,    Fp)      bias (f32), zero-padded
    # o_ref:   (TILE, Fp)      output tile (written once, on last k step)
    # acc_ref: (TILE, Fp)      f32 VMEM accumulator
    k = pl.program_id(2)

    @pl.when(k == 0)
    def _init():
        acc_ref[...] = jnp.zeros_like(acc_ref)

    # support tile for this k slice: (TILE, Fp), f32 accumulation on the MXU.
    support = jnp.dot(x_ref[...], w_ref[...], preferred_element_type=jnp.float32)
    # Accumulate adj @ support for this k slice (second MXU pass, f32 acc).
    acc_ref[...] += jnp.dot(
        adj_ref[...],
        support.astype(adj_ref.dtype),
        preferred_element_type=jnp.float32,
    )

    @pl.when(k == pl.num_programs(2) - 1)
    def _finalize():
        out = acc_ref[...] + b_ref[...].astype(jnp.float32)
        o_ref[...] = out.astype(o_ref.dtype)


@functools.partial(jax.jit, static_argnames=("node_tile", "compute_dtype", "out_dtype"))
def graph_convolution(x, adj, weight, bias=None, *,
                      node_tile=256, compute_dtype=None, out_dtype=None):
    """GCN forward: adj @ (x @ weight) + bias.

    x:      (B, N, Fin)
    adj:    (B, N, N)
    weight: (Fin, Fout)
    bias:   (Fout,) or None
    node_tile:     node tile size (TN == TK).  256 is MXU-aligned on all gens;
                   raise to 512/1024 on v6e if N is large and divisible.
    compute_dtype: e.g. jnp.bfloat16 to halve HBM traffic on x/adj/weight
                   (accumulation stays f32).
    """
    B, N, Fin = x.shape
    Fin_w, Fout = weight.shape
    assert Fin_w == Fin, "weight in_features mismatch"
    assert adj.shape == (B, N, N), "adj must be (B, N, N)"

    out_dtype = out_dtype or x.dtype
    cdt = compute_dtype or x.dtype

    # Lane-dense output: pad Fout up to a multiple of 128 (padded cols sliced off).
    Fp = _round_up(Fout, 128)

    # Node tiling (same tile for output rows and the node reduction).
    if N >= node_tile:
        tile = node_tile
    else:
        tile = _round_up(max(N, 8), 8)
    Np = _round_up(N, tile)

    # Pad / cast operands in the wrapper.  Zero padding is exact:
    # padded adj rows/cols and padded weight cols contribute zero and are sliced off.
    xp = jnp.pad(x, ((0, 0), (0, Np - N), (0, 0))).astype(cdt)
    adjp = jnp.pad(adj, ((0, 0), (0, Np - N), (0, Np - N))).astype(cdt)
    wp = jnp.pad(weight, ((0, 0), (0, Fp - Fout))).astype(cdt)
    if bias is None:
        # TODO(synk): bias=False path handled by passing zeros (keeps single kernel).
        bp = jnp.zeros((1, Fp), jnp.float32)
    else:
        bp = jnp.pad(bias.reshape(1, Fout).astype(jnp.float32),
                     ((0, 0), (0, Fp - Fout)))

    grid = (B, Np // tile, Np // tile)   # (batch, out-node tile i, reduction tile k)

    out = pl.pallas_call(
        _gcn_kernel,
        out_shape=jax.ShapeDtypeStruct((B, Np, Fp), out_dtype),
        grid_spec=pltpu.PrefetchScalarGridSpec(
            num_scalar_prefetch=0,
            grid=grid,
            in_specs=[
                # x: rows indexed by the reduction tile k
                pl.BlockSpec((pl.Squeezed(), tile, Fin), lambda b, i, k: (b, k, 0)),
                # adj: (output tile i, reduction tile k)
                pl.BlockSpec((pl.Squeezed(), tile, tile), lambda b, i, k: (b, i, k)),
                # weight / bias: constant block -> no re-DMA across grid steps
                pl.BlockSpec((Fin, Fp), lambda b, i, k: (0, 0)),
                pl.BlockSpec((1, Fp), lambda b, i, k: (0, 0)),
            ],
            # output tile reused across the k axis (accumulator pattern)
            out_specs=pl.BlockSpec((pl.Squeezed(), tile, Fp), lambda b, i, k: (b, i, 0)),
            scratch_shapes=[pltpu.VMEM((tile, Fp), jnp.float32)],
        ),
        compiler_params=pltpu.CompilerParams(
            # batch / node-row tiles parallel (megacore), reduction axis arbitrary & last
            dimension_semantics=("parallel", "parallel", "arbitrary"),
            # explicit budget: safe on v7x (64 MiB physical), above v6e's 32 MiB default
            vmem_limit_bytes=48 * 1024 * 1024,
        ),
    )(xp, adjp, wp, bp)

    return out[:, :N, :Fout]


def gcn_reference(x, adj, weight, bias):
    support = jnp.einsum("bij,jk->bik", x, weight)
    out = jnp.einsum("bij,bjk->bik", adj, support)
    return out + bias if bias is not None else out


if __name__ == "__main__":
    # Module config: in_features=32, out_features=16 (fea_nums unused in forward).
    B, N, Fin, Fout = 2, 8, 32, 16

    key = jax.random.PRNGKey(0)
    kx, kadj, kw, kb = jax.random.split(key, 4)

    # Deterministic init mimicking reset_parameters: uniform(-stdv, stdv)
    stdv = 1.0 / math.sqrt(Fout)
    weight = jax.random.uniform(kw, (Fin, Fout), jnp.float32, -stdv, stdv)
    bias = jax.random.uniform(kb, (Fout,), jnp.float32, -stdv, stdv)

    x = jax.random.normal(kx, (B, N, Fin), jnp.float32)
    adj = jax.random.normal(kadj, (B, N, N), jnp.float32)

    ref = gcn_reference(x, adj, weight, bias)

    # f32 path: exact match vs reference.
    out = graph_convolution(x, adj, weight, bias)
    out = jax.block_until_ready(out)
    assert out.shape == (B, N, Fout)
    assert jnp.allclose(out, ref, atol=1e-5, rtol=1e-5), "f32 mismatch vs reference"

    # bf16 compute path (halves HBM traffic for adj/x; f32 accumulation).
    out_bf16 = graph_convolution(x, adj, weight, bias, compute_dtype=jnp.bfloat16)
    out_bf16 = jax.block_until_ready(out_bf16)
    assert jnp.allclose(out_bf16, ref, atol=1e-1, rtol=1e-1), "bf16 mismatch vs reference"

    print("KERNEL_OK")
</pallas_src>

<mosaic_0001>
module attributes {stable_mosaic.version = 11 : i64} {
  func.func @_gcn_kernel(%arg0: i32, %arg1: i32, %arg2: i32, %arg3: memref<1x8x32xf32, #tpu.memory_space<vmem>>, %arg4: memref<1x8x8xf32, #tpu.memory_space<vmem>>, %arg5: memref<32x128xf32, #tpu.memory_space<vmem>>, %arg6: memref<1x128xf32, #tpu.memory_space<vmem>>, %arg7: memref<1x8x128xf32, #tpu.memory_space<vmem>>, %arg8: memref<8x128xf32, #tpu.memory_space<vmem>>) attributes {dimension_semantics = [#tpu.dimension_semantics<parallel>, #tpu.dimension_semantics<parallel>, #tpu.dimension_semantics<arbitrary>], iteration_bounds = array<i64: 2, 1, 1>, scalar_prefetch = 0 : i64, scratch_operands = 1 : i64, tpu.core_type = #tpu.core_type<tc>, window_params = [{transform_indices = @transform_0, window_bounds = array<i64: 1, 8, 32>}, {transform_indices = @transform_1, window_bounds = array<i64: 1, 8, 8>}, {pipeline_mode = #tpu.pipeline_mode<synchronous>, transform_indices = @transform_2, window_bounds = array<i64: 32, 128>}, {pipeline_mode = #tpu.pipeline_mode<synchronous>, transform_indices = @transform_3, window_bounds = array<i64: 1, 128>}, {transform_indices = @transform_4, window_bounds = array<i64: 1, 8, 128>}]} {
    %c0_i32 = arith.constant 0 : i32
    %0 = arith.cmpi eq, %arg2, %c0_i32 : i32
    %1 = arith.extui %0 : i1 to i32
    %c0_i32_0 = arith.constant 0 : i32
    %2 = arith.cmpi ne, %1, %c0_i32_0 : i32
    scf.if %2 {
      %cst_15 = arith.constant 0.000000e+00 : f32
      %16 = vector.broadcast %cst_15 : f32 to vector<8x128xf32>
      %c0_16 = arith.constant 0 : index
      %c0_17 = arith.constant 0 : index
      %17 = vector.load %arg8[%c0_16, %c0_17] : memref<8x128xf32, #tpu.memory_space<vmem>>, vector<8x128xf32>
      tpu.vector_store %arg8[%c0_16, %c0_17], %16 {strides = array<i32>} : memref<8x128xf32, #tpu.memory_space<vmem>>, vector<8x128xf32>,
    } else {
    }
    %c0 = arith.constant 0 : index
    %c0_1 = arith.constant 0 : index
    %c0_2 = arith.constant 0 : index
    %3 = vector.load %arg3[%c0, %c0_1, %c0_2] : memref<1x8x32xf32, #tpu.memory_space<vmem>>, vector<1x8x32xf32>
    %4 = vector.shape_cast %3 : vector<1x8x32xf32> to vector<8x32xf32>
    %c0_3 = arith.constant 0 : index
    %c0_4 = arith.constant 0 : index
    %5 = vector.load %arg5[%c0_3, %c0_4] : memref<32x128xf32, #tpu.memory_space<vmem>>, vector<32x128xf32>
    %cst = arith.constant dense<0.000000e+00> : vector<8x128xf32>
    %6 = tpu.matmul %4, %5, %cst {dimension_numbers = #tpu.dot_dimension_numbers<[1], [0], [0], [1], [0, 0, 1, 1], [], []>} : vector<8x32xf32>, vector<32x128xf32>, vector<8x128xf32> -> vector<8x128xf32>
    %c0_5 = arith.constant 0 : index
    %c0_6 = arith.constant 0 : index
    %7 = vector.load %arg8[%c0_5, %c0_6] : memref<8x128xf32, #tpu.memory_space<vmem>>, vector<8x128xf32>
    %c0_7 = arith.constant 0 : index
    %c0_8 = arith.constant 0 : index
    %c0_9 = arith.constant 0 : index
    %8 = vector.load %arg4[%c0_7, %c0_8, %c0_9] : memref<1x8x8xf32, #tpu.memory_space<vmem>>, vector<1x8x8xf32>
    %9 = vector.shape_cast %8 : vector<1x8x8xf32> to vector<8x8xf32>
    %cst_10 = arith.constant dense<0.000000e+00> : vector<8x128xf32>
    %10 = tpu.matmul %9, %6, %cst_10 {dimension_numbers = #tpu.dot_dimension_numbers<[1], [0], [0], [1], [0, 0, 1, 1], [], []>} : vector<8x8xf32>, vector<8x128xf32>, vector<8x128xf32> -> vector<8x128xf32>
    %11 = arith.addf %7, %10 : vector<8x128xf32>
    %c0_11 = arith.constant 0 : index
    %c0_12 = arith.constant 0 : index
    %12 = vector.load %arg8[%c0_11, %c0_12] : memref<8x128xf32, #tpu.memory_space<vmem>>, vector<8x128xf32>
    tpu.vector_store %arg8[%c0_11, %c0_12], %11 {strides = array<i32>} : memref<8x128xf32, #tpu.memory_space<vmem>>, vector<8x128xf32>,
    %c0_i32_13 = arith.constant 0 : i32
    %13 = arith.cmpi eq, %arg2, %c0_i32_13 : i32
    %14 = arith.extui %13 : i1 to i32
    %c0_i32_14 = arith.constant 0 : i32
    %15 = arith.cmpi ne, %14, %c0_i32_14 : i32
    scf.if %15 {
      %c0_15 = arith.constant 0 : index
      %c0_16 = arith.constant 0 : index
      %16 = vector.load %arg8[%c0_15, %c0_16] : memref<8x128xf32, #tpu.memory_space<vmem>>, vector<8x128xf32>
      %c0_17 = arith.constant 0 : index
      %c0_18 = arith.constant 0 : index
      %17 = vector.load %arg6[%c0_17, %c0_18] : memref<1x128xf32, #tpu.memory_space<vmem>>, vector<1x128xf32>
      %18 = vector.broadcast %17 : vector<1x128xf32> to vector<8x128xf32>
      %19 = arith.addf %16, %18 : vector<8x128xf32>
      %c0_19 = arith.constant 0 : index
      %c0_20 = arith.constant 0 : index
      %c0_21 = arith.constant 0 : index
      %20 = vector.load %arg7[%c0_19, %c0_20, %c0_21] : memref<1x8x128xf32, #tpu.memory_space<vmem>>, vector<1x8x128xf32>
      %21 = vector.shape_cast %20 : vector<1x8x128xf32> to vector<8x128xf32>
      %22 = vector.shape_cast %19 : vector<8x128xf32> to vector<1x8x128xf32>
      tpu.vector_store %arg7[%c0_19, %c0_20, %c0_21], %22 {strides = array<i32>} : memref<1x8x128xf32, #tpu.memory_space<vmem>>, vector<1x8x128xf32>,
    } else {
    }
    return
  }
  func.func @transform_0(%arg0: i32, %arg1: i32, %arg2: i32) -> (i32, i32, i32) {
    %c0_i32 = arith.constant 0 : i32
    %c0_i32_0 = arith.constant 0 : i32
    return %arg0, %arg2, %c0_i32 : i32, i32, i32
  }
  func.func @transform_1(%arg0: i32, %arg1: i32, %arg2: i32) -> (i32, i32, i32) {
    %c0_i32 = arith.constant 0 : i32
    return %arg0, %arg1, %arg2 : i32, i32, i32
  }
  func.func @transform_2(%arg0: i32, %arg1: i32, %arg2: i32) -> (i32, i32) {
    %c0_i32 = arith.constant 0 : i32
    %c0_i32_0 = arith.constant 0 : i32
    %c0_i32_1 = arith.constant 0 : i32
    return %c0_i32, %c0_i32_0 : i32, i32
  }
  func.func @transform_3(%arg0: i32, %arg1: i32, %arg2: i32) -> (i32, i32) {
    %c0_i32 = arith.constant 0 : i32
    %c0_i32_0 = arith.constant 0 : i32
    %c0_i32_1 = arith.constant 0 : i32
    return %c0_i32, %c0_i32_0 : i32, i32
  }
  func.func @transform_4(%arg0: i32, %arg1: i32, %arg2: i32) -> (i32, i32, i32) {
    %c0_i32 = arith.constant 0 : i32
    %c0_i32_0 = arith.constant 0 : i32
    return %arg0, %arg1, %c0_i32 : i32, i32, i32
  }
}

</mosaic_0001>

<llo_original>
// kernel: graph_convolution.1
$region0: #{graph_convolution.1}
  #allocation0 [shape = 'u32[]', space=smem, size = 0x4, offset = 0x4, fixed_abs, tag = 'smem constant byte address 0x4 - core index']
  #allocation1 [shape = 'u32[144,128]{1,0:T(1,128)}', space=vmem, size = 0x12000, scoped, tag = 'internal scratch']
  #allocation2 [shape = 'f32[8,128]{1,0:T(8,128)}', space=vmem, size = 0x1000, scoped, tag = 'scratch operand']
  %s0 = inlined_call_operand.vmem [shape: f32[2,8,32], index: 0, kind: input, shape index: {}]
  %s1 = inlined_call_operand.vmem [shape: f32[2,8,8], index: 1, kind: input, shape index: {}]
  %s2 = inlined_call_operand.vmem [shape: f32[32,128], index: 2, kind: input, shape index: {}]
  %s3 = inlined_call_operand.vmem [shape: f32[1,128], index: 3, kind: input, shape index: {}]
  %s4 = inlined_call_operand.hbm [shape: f32[2,8,128], index: 4, kind: output, shape index: {}]
  %s5 = sld [smem:[#allocation0]]
  $region57: #{graph_convolution.1} parent=0
    _
  %s7 = ssub.s32 1, %s5
  %s8 = scalar_select 0, %s7, %s5
  $region1: #{graph_convolution.1} parent=0
    #allocation3 [shape = 'u8[8192]{0}', space=vmem, size = 0x2000, scoped, tag = 'output window, operand 0']
    #allocation4 [shape = 's32[2]{0}', space=sflag, size = 0x8, scoped, tag = 'scoped memory for graph_convolution.1']
    %9 = vsyncpa [#allocation4], 0
    %s10 = scalar_lea.sflag [#allocation4], 1
    %11 = vsyncpa %s10, 0
    loop: start=0, step=1, limit=4
    $region2: #{graph_convolution.1} parent=1 // loop_pre_header
      _
    $region3: #{graph_convolution.1} parent=1 // loop_header
      %s13 = sphi 0, %s17
      %p14 = scmp.ge.s32.totalorder %s13, 4
      %s20 = sphi 0, %s39
      %s21 = sphi 0, %s35
      %s22 = sphi 0, %s31
      %s23 = sphi 0, %s20
      %s24 = sphi 0, %s21
      %s25 = sphi 0, %s22
      %s26 = sphi 0, %s23
      %s27 = sphi 0, %s24
      %s28 = sphi 0, %s25
      %s44 = sphi 0, %s46
      %s47 = sphi 0, %s44
      %s48 = sphi 0, %s47
      %s64 = sphi 0, %s48
      %s74 = sphi 0, %s76
      %s77 = sphi 0, %s74
      %s78 = sphi 0, %s77
      %s94 = sphi 0, %s78
      %s98 = sphi 0, %s98
      %s100 = sphi 0, %s98
      %s101 = sphi 0, %s100
      %s115 = sphi 0, %s101
      %s119 = sphi 0, %s119
      %s121 = sphi 0, %s119
      %s122 = sphi 0, %s121
      %s136 = sphi 0, %s122
      %s144 = sphi 0, %s146
      %s147 = sphi 0, %s144
      %s148 = sphi 0, %s147
      %s164 = sphi 0, %s148
    $region4: #{graph_convolution.1} parent=1 // loop_header_branch
      %16 = sbr.rel (%p14) target = $region8
    $region5: #{graph_convolution.1} parent=1 // loop_body
      %s18 = ssub.s32 %s13, 1
      %s19 = ssub.s32 %s13, 2
      %s29 = sadd.s32 1, %s22
      %p30 = scmp.ge.s32.totalorder %s29, 1
      %s31 = scalar_select %p30, 0, %s29
      %s32 = sadd.s32 1, %s21
      %s33 = scalar_select %p30, %s32, %s21
      %p34 = scmp.ge.s32.totalorder %s33, 1
      %s35 = scalar_select %p34, 0, %s33
      %s36 = sadd.s32 1, %s20
      %s37 = scalar_select %p34, %s36, %s20
      %p38 = scmp.ge.s32.totalorder %s37, 2
      %s39 = scalar_select %p38, 0, %s37
      %s40 = ssub.s32 %s20, %s39
      %s41 = ssub.s32 %s22, %s31
      %s42 = sor.u32 %s40, %s41
      %p43 = scmp.eq.s32.totalorder %s42, 0
      %s45 = sadd.s32 %s44, 1
      %s46 = scalar_select %p43, %s44, %s45
      %p49 = pneg %p43
      %p50 = scmp.eq.s32.totalorder %s13, 1
      %p51 = por %p49, %p50
      %p52 = scmp.ne.s32.totalorder %s44, %s47
      %p53 = scmp.eq.s32.totalorder %s13, 0
      %p54 = por %p52, %p53
      %p55 = scmp.ne.s32.totalorder %s44, %s47
      %p56 = scmp.eq.s32.totalorder %s18, 1
      %p57 = por %p55, %p56
      %p58 = scmp.ne.s32.totalorder %s47, %s48
      %p59 = scmp.eq.s32.totalorder %s18, 0
      %p60 = por %p58, %p59
      %p61 = scmp.ne.s32.totalorder %s47, %s48
      %p62 = scmp.eq.s32.totalorder %s19, 1
      %p63 = por %p61, %p62
      %p65 = scmp.ne.s32.totalorder %s48, %s64
      %p66 = scmp.eq.s32.totalorder %s19, 0
      %p67 = por %p65, %p66
      %s68 = ssub.s32 %s20, %s39
      %s69 = ssub.s32 %s21, %s35
      %s70 = sor.u32 %s68, %s69
      %s71 = ssub.s32 %s22, %s31
      %s72 = sor.u32 %s70, %s71
      %p73 = scmp.eq.s32.totalorder %s72, 0
      %s75 = sadd.s32 %s74, 1
      %s76 = scalar_select %p73, %s74, %s75
      %p79 = pneg %p73
      %p80 = scmp.eq.s32.totalorder %s13, 1
      %p81 = por %p79, %p80
      %p82 = scmp.ne.s32.totalorder %s74, %s77
      %p83 = scmp.eq.s32.totalorder %s13, 0
      %p84 = por %p82, %p83
      %p85 = scmp.ne.s32.totalorder %s74, %s77
      %p86 = scmp.eq.s32.totalorder %s18, 1
      %p87 = por %p85, %p86
      %p88 = scmp.ne.s32.totalorder %s77, %s78
      %p89 = scmp.eq.s32.totalorder %s18, 0
      %p90 = por %p88, %p89
      %p91 = scmp.ne.s32.totalorder %s77, %s78
      %p92 = scmp.eq.s32.totalorder %s19, 1
      %p93 = por %p91, %p92
      %p95 = scmp.ne.s32.totalorder %s78, %s94
      %p96 = scmp.eq.s32.totalorder %s19, 0
      %p97 = por %p95, %p96
      %s99 = sadd.s32 %s98, 1
      %p102 = scmp.eq.s32.totalorder %s13, 1
      %p103 = scmp.ne.s32.totalorder %s98, %s100
      %p104 = scmp.eq.s32.totalorder %s13, 0
      %p105 = por %p103, %p104
      %p106 = scmp.ne.s32.totalorder %s98, %s100
      %p107 = scmp.eq.s32.totalorder %s18, 1
      %p108 = por %p106, %p107
      %p109 = scmp.ne.s32.totalorder %s100, %s101
      %p110 = scmp.eq.s32.totalorder %s18, 0
      %p111 = por %p109, %p110
      %p112 = scmp.ne.s32.totalorder %s100, %s101
      %p113 = scmp.eq.s32.totalorder %s19, 1
      %p114 = por %p112, %p113
      %p116 = scmp.ne.s32.totalorder %s101, %s115
      %p117 = scmp.eq.s32.totalorder %s19, 0
      %p118 = por %p116, %p117
      %s120 = sadd.s32 %s119, 1
      %p123 = scmp.eq.s32.totalorder %s13, 1
      %p124 = scmp.ne.s32.totalorder %s119, %s121
      %p125 = scmp.eq.s32.totalorder %s13, 0
      %p126 = por %p124, %p125
      %p127 = scmp.ne.s32.totalorder %s119, %s121
      %p128 = scmp.eq.s32.totalorder %s18, 1
      %p129 = por %p127, %p128
      %p130 = scmp.ne.s32.totalorder %s121, %s122
      %p131 = scmp.eq.s32.totalorder %s18, 0
      %p132 = por %p130, %p131
      %p133 = scmp.ne.s32.totalorder %s121, %s122
      %p134 = scmp.eq.s32.totalorder %s19, 1
      %p135 = por %p133, %p134
      %p137 = scmp.ne.s32.totalorder %s122, %s136
      %p138 = scmp.eq.s32.totalorder %s19, 0
      %p139 = por %p137, %p138
      %s140 = ssub.s32 %s20, %s39
      %s141 = ssub.s32 %s21, %s35
      %s142 = sor.u32 %s140, %s141
      %p143 = scmp.eq.s32.totalorder %s142, 0
      %s145 = sadd.s32 %s144, 1
      %s146 = scalar_select %p143, %s144, %s145
      %p149 = pneg %p143
      %p150 = scmp.eq.s32.totalorder %s13, 1
      %p151 = por %p149, %p150
      %p152 = scmp.ne.s32.totalorder %s144, %s147
      %p153 = scmp.eq.s32.totalorder %s13, 0
      %p154 = por %p152, %p153
      %p155 = scmp.ne.s32.totalorder %s144, %s147
      %p156 = scmp.eq.s32.totalorder %s18, 1
      %p157 = por %p155, %p156
      %p158 = scmp.ne.s32.totalorder %s147, %s148
      %p159 = scmp.eq.s32.totalorder %s18, 0
      %p160 = por %p158, %p159
      %p161 = scmp.ne.s32.totalorder %s147, %s148
      %p162 = scmp.eq.s32.totalorder %s19, 1
      %p163 = por %p161, %p162
      %p165 = scmp.ne.s32.totalorder %s148, %s164
      %p166 = scmp.eq.s32.totalorder %s19, 0
      %p167 = por %p165, %p166
      %p168 = scmp.le.s32.totalorder 1, %s13
      %p169 = scmp.lt.s32.totalorder %s13, 3
      %p170 = pnand %p168, %p169
      %p171 = pneg %p170
      // Predicated region
      $region9: #{graph_convolution.1} parent=5 // pred_check
        _
      $region10: #{graph_convolution.1} parent=5 // pred_check_branch
        %173 = sbr.rel (%p170) target = $region12
      $region11: #{graph_convolution.1} parent=5 // pred_region
        %s174 = ssub.s32 %s13, 1
        // Predicated region
        $region13: #{graph_convolution.1} parent=11 // pred_check
          %p175 = pneg %p111
        $region14: #{graph_convolution.1} parent=11 // pred_check_branch
          %177 = sbr.rel (%p175) target = $region16
        $region15: #{graph_convolution.1} parent=11 // pred_region
          _
        $region16: #{graph_convolution.1} parent=11 // pred_fallthru
          _
        // Predicated region
        $region17: #{graph_convolution.1} parent=11 // pred_check
          %p178 = pneg %p132
        $region18: #{graph_convolution.1} parent=11 // pred_check_branch
          %180 = sbr.rel (%p178) target = $region20
        $region19: #{graph_convolution.1} parent=11 // pred_region
          _
        $region20: #{graph_convolution.1} parent=11 // pred_fallthru
          _
      $region12: #{graph_convolution.1} parent=5 // pred_fallthru
        _
      %p181 = scmp.lt.s32.totalorder %s13, 2
      // Predicated region
      $region21: #{graph_convolution.1} parent=5 // pred_check
        %p182 = pneg %p181
      $region22: #{graph_convolution.1} parent=5 // pred_check_branch
        %184 = sbr.rel (%p182) target = $region24
      $region23: #{graph_convolution.1} parent=5 // pred_region
        // Predicated region
        $region25: #{graph_convolution.1} parent=23 // pred_check
          %p185 = pneg %p54
        $region26: #{graph_convolution.1} parent=23 // pred_check_branch
          %187 = sbr.rel (%p185) target = $region28
        $region27: #{graph_convolution.1} parent=23 // pred_region
          %p188 = scmp.lt.s32.totalorder %s20, 1
          %s189 = scalar_select %p188, %s20, 1
          %p190 = scmp.lt.s32.totalorder %s22, 0
          %s191 = scalar_select %p190, %s22, 0
          %s192 = sadd.s32 %s191, %s189
          %s193 = smul.addr %s192, 8
          %s194 = scalar_lea.vmem %s0, %s193
        $region28: #{graph_convolution.1} parent=23 // pred_fallthru
          _
        // Predicated region
        $region29: #{graph_convolution.1} parent=23 // pred_check
          %p195 = pneg %p84
        $region30: #{graph_convolution.1} parent=23 // pred_check_branch
          %197 = sbr.rel (%p195) target = $region32
        $region31: #{graph_convolution.1} parent=23 // pred_region
          %p198 = scmp.lt.s32.totalorder %s20, 1
          %s199 = scalar_select %p198, %s20, 1
          %p200 = scmp.lt.s32.totalorder %s21, 0
          %s201 = scalar_select %p200, %s21, 0
          %p202 = scmp.lt.s32.totalorder %s22, 0
          %s203 = scalar_select %p202, %s22, 0
          %s204 = sadd.s32 %s203, %s201
          %s205 = sadd.s32 %s204, %s199
          %s206 = smul.addr %s205, 8
          %s207 = scalar_lea.vmem %s1, %s206
        $region32: #{graph_convolution.1} parent=23 // pred_fallthru
          _
      $region24: #{graph_convolution.1} parent=5 // pred_fallthru
        _
      %p208 = scmp.le.s32.totalorder 1, %s13
      %p209 = scmp.lt.s32.totalorder %s13, 3
      %p210 = pnand %p208, %p209
      %p211 = pneg %p210
      // Predicated region
      $region33: #{graph_convolution.1} parent=5 // pred_check
        _
      $region34: #{graph_convolution.1} parent=5 // pred_check_branch
        %213 = sbr.rel (%p210) target = $region36
      $region35: #{graph_convolution.1} parent=5 // pred_region
        %s214 = ssub.s32 %s13, 1
        %p215 = scmp.lt.s32.totalorder %s23, 1
        %s216 = scalar_select %p215, %s23, 1
        %p217 = scmp.lt.s32.totalorder %s25, 0
        %s218 = scalar_select %p217, %s25, 0
        %s219 = sadd.s32 %s218, %s216
        %s220 = smul.addr %s219, 8
        %s221 = scalar_lea.vmem %s0, %s220
        %p222 = pneg %p60
        %p223 = pneg %p57
        %p224 = scmp.lt.s32.totalorder %s23, 1
        %s225 = scalar_select %p224, %s23, 1
        %p226 = scmp.lt.s32.totalorder %s24, 0
        %s227 = scalar_select %p226, %s24, 0
        %p228 = scmp.lt.s32.totalorder %s25, 0
        %s229 = scalar_select %p228, %s25, 0
        %s230 = sadd.s32 %s229, %s227
        %s231 = sadd.s32 %s230, %s225
        %s232 = smul.addr %s231, 8
        %s233 = scalar_lea.vmem %s1, %s232
        %p234 = pneg %p90
        %p235 = pneg %p87
        %p236 = pneg %p111
        %p237 = pneg %p108
        %p238 = pneg %p132
        %p239 = pneg %p129
        %p240 = pneg %p160
        %p241 = pneg %p157
        %s242 = sand.u32 %s147, 1
        %s243 = scalar_lea.sflag [#allocation4], %s242
        %s244 = sand.u32 %s147, 1
        %s245 = smul.addr %s244, 8
        %s246 = scalar_lea.vmem [#allocation3], %s245
        %p247 = scmp.lt.s32.totalorder %s23, 1
        %s248 = scalar_select %p247, %s23, 1
        %p249 = scmp.lt.s32.totalorder %s25, 0
        %s250 = scalar_select %p249, %s25, 0
        %s251 = sadd.s32 %s250, %s248
        %s252 = smul.addr %s251, 8
        %s253 = scalar_lea.vmem %s0, %s252
        %p254 = scmp.lt.s32.totalorder %s23, 1
        %s255 = scalar_select %p254, %s23, 1
        %p256 = scmp.lt.s32.totalorder %s24, 0
        %s257 = scalar_select %p256, %s24, 0
        %p258 = scmp.lt.s32.totalorder %s25, 0
        %s259 = scalar_select %p258, %s25, 0
        %s260 = sadd.s32 %s259, %s257
        %s261 = sadd.s32 %s260, %s255
        %s262 = smul.addr %s261, 8
        %s263 = scalar_lea.vmem %s1, %s262
        %p264 = scmp.eq.s32.totalorder %s25, 0
        // Predicated region
        $region37: #{graph_convolution.1} parent=35 // pred_check
          %p265 = pneg %p264
        $region38: #{graph_convolution.1} parent=35 // pred_check_branch
          %267 = sbr.rel (%p265) target = $region40
        $region39: #{graph_convolution.1} parent=35 // pred_region
          %268 = vst [vmem:[#allocation2] sm:$0xff] 0.0
        $region40: #{graph_convolution.1} parent=35 // pred_fallthru
          _
        %v269 = vld [vmem:[%s253] sm:$0xff]
        %v270 = vld [vmem:[%s2] sm:$0xff]
        %v271 = vld [vmem:[%s2 + $0x8] sm:$0xff]
        %v272 = vld [vmem:[%s2 + $0x10] sm:$0xff]
        %v273 = vld [vmem:[%s2 + $0x18] sm:$0xff]
        %vm274 = vcmask 261120
        %v276 = vsel %vm274, %v269, 0
        %278 = vmatprep.subr.mxu0 0.0
        %279 = vmatpush1.msra.mxu0 %v270
        %280 = vmatprep.subr.mxu0 0.0
        %281 = vmatpush1.msra.mxu0 %v271
        %282 = vmatprep.subr.mxu0 0.0
        %283 = vmatpush1.msra.mxu0 %v272
        %284 = vmatprep.subr.mxu0 0.0
        %285 = vmatpush1.msra.mxu0 %v273
        %286 = vmatprep.subr.mxu0 0.0
        %287 = vmatpush1.msra.mxu0 0.0
        %288 = vmatprep.subr.mxu0 0.0
        %289 = vmatpush1.msra.mxu0 0.0
        %290 = vmatprep.subr.mxu0 0.0
        %291 = vmatpush1.msra.mxu0 0.0
        %292 = vmatprep.subr.mxu0 0.0
        %293 = vmatpush1.msra.mxu0 0.0
        %294 = vmatprep.subr.mxu0 0.0
        %295 = vmatpush1.msra.mxu0 0.0
        %296 = vmatprep.subr.mxu0 0.0
        %297 = vmatpush1.msra.mxu0 0.0
        %298 = vmatprep.subr.mxu0 0.0
        %299 = vmatpush1.msra.mxu0 0.0
        %300 = vmatprep.subr.mxu0 0.0
        %301 = vmatpush1.msra.mxu0 0.0
        %302 = vmatprep.subr.mxu0 0.0
        %303 = vmatpush1.msra.mxu0 0.0
        %304 = vmatprep.subr.mxu0 0.0
        %305 = vmatpush1.msra.mxu0 0.0
        %306 = vmatprep.subr.mxu0 0.0
        %307 = vmatpush1.msra.mxu0 0.0
        %308 = vmatprep.subr.mxu0 0.0
        %309 = vmatpush1.msra.mxu0 0.0
        %310 = vmatprep.subr.mxu0 0.0
        %311 = vmatpush1.msra.mxu0 0.0
        %312 = vmatprep.subr.mxu0 0.0
        %313 = vmatpush1.msra.mxu0 0.0
        %314 = vmatprep.subr.mxu0 0.0
        %315 = vmatpush1.msra.mxu0 0.0
        %316 = vmatprep.subr.mxu0 0.0
        %317 = vmatpush1.msra.mxu0 0.0
        %318 = vmatprep.subr.mxu0 0.0
        %319 = vmatpush1.msra.mxu0 0.0
        %320 = vmatprep.subr.mxu0 0.0
        %321 = vmatpush1.msra.mxu0 0.0
        %322 = vmatprep.subr.mxu0 0.0
        %323 = vmatpush1.msra.mxu0 0.0
        %324 = vmatprep.subr.mxu0 0.0
        %325 = vmatpush1.msra.mxu0 0.0
        %326 = vmatprep.subr.mxu0 0.0
        %327 = vmatpush1.msra.mxu0 0.0
        %328 = vmatprep.subr.mxu0 0.0
        %329 = vmatpush1.msra.mxu0 0.0
        %330 = vmatprep.subr.mxu0 0.0
        %331 = vmatpush1.msra.mxu0 0.0
        %332 = vmatprep.subr.mxu0 0.0
        %333 = vmatpush1.msra.mxu0 0.0
        %334 = vmatprep.subr.mxu0 0.0
        %335 = vmatpush1.msra.mxu0 0.0
        %336 = vmatprep.subr.mxu0 0.0
        %337 = vmatpush1.msra.mxu0 0.0
        %338 = vmatprep.subr.mxu0 0.0
        %339 = vmatpush1.msra.mxu0 0.0
        %340 = vmatprep.subr.mxu0 0.0
        %341 = vmatpush1.msra.mxu0 0.0
        %342 = vmatprep.mubr.f32.mxu0 0.0
        %343 = vmatmul.mubr.f32.gmra.mrb[0].mxu0 %v276
        %v344 = vpop.f32.mrb[0].mxu0
        %v345 = vadd.f32 0.0, %v344
        %v346 = vpop.f32.mrb[0].mxu0
        %347 = vdwg.mxu0
        %v348 = vld [vmem:[#allocation2] sm:$0xff]
        %v349 = vld [vmem:[%s263] sm:$0xff]
        %vm350 = vcmask 64512
        %v352 = vsel %vm350, %v349, 0
        %354 = vmatprep.subr.mxu0 0.0
        %355 = vmatpush1.msra.mxu0 %v345
        %356 = vmatprep.subr.mxu0 0.0
        %357 = vmatpush1.msra.mxu0 0.0
        %358 = vmatprep.subr.mxu0 0.0
        %359 = vmatpush1.msra.mxu0 0.0
        %360 = vmatprep.subr.mxu0 0.0
        %361 = vmatpush1.msra.mxu0 0.0
        %362 = vmatprep.subr.mxu0 0.0
        %363 = vmatpush1.msra.mxu0 0.0
        %364 = vmatprep.subr.mxu0 0.0
        %365 = vmatpush1.msra.mxu0 0.0
        %366 = vmatprep.subr.mxu0 0.0
        %367 = vmatpush1.msra.mxu0 0.0
        %368 = vmatprep.subr.mxu0 0.0
        %369 = vmatpush1.msra.mxu0 0.0
        %370 = vmatprep.subr.mxu0 0.0
        %371 = vmatpush1.msra.mxu0 0.0
        %372 = vmatprep.subr.mxu0 0.0
        %373 = vmatpush1.msra.mxu0 0.0
        %374 = vmatprep.subr.mxu0 0.0
        %375 = vmatpush1.msra.mxu0 0.0
        %376 = vmatprep.subr.mxu0 0.0
        %377 = vmatpush1.msra.mxu0 0.0
        %378 = vmatprep.subr.mxu0 0.0
        %379 = vmatpush1.msra.mxu0 0.0
        %380 = vmatprep.subr.mxu0 0.0
        %381 = vmatpush1.msra.mxu0 0.0
        %382 = vmatprep.subr.mxu0 0.0
        %383 = vmatpush1.msra.mxu0 0.0
        %384 = vmatprep.subr.mxu0 0.0
        %385 = vmatpush1.msra.mxu0 0.0
        %386 = vmatprep.subr.mxu0 0.0
        %387 = vmatpush1.msra.mxu0 0.0
        %388 = vmatprep.subr.mxu0 0.0
        %389 = vmatpush1.msra.mxu0 0.0
        %390 = vmatprep.subr.mxu0 0.0
        %391 = vmatpush1.msra.mxu0 0.0
        %392 = vmatprep.subr.mxu0 0.0
        %393 = vmatpush1.msra.mxu0 0.0
        %394 = vmatprep.subr.mxu0 0.0
        %395 = vmatpush1.msra.mxu0 0.0
        %396 = vmatprep.subr.mxu0 0.0
        %397 = vmatpush1.msra.mxu0 0.0
        %398 = vmatprep.subr.mxu0 0.0
        %399 = vmatpush1.msra.mxu0 0.0
        %400 = vmatprep.subr.mxu0 0.0
        %401 = vmatpush1.msra.mxu0 0.0
        %402 = vmatprep.subr.mxu0 0.0
        %403 = vmatpush1.msra.mxu0 0.0
        %404 = vmatprep.subr.mxu0 0.0
        %405 = vmatpush1.msra.mxu0 0.0
        %406 = vmatprep.subr.mxu0 0.0
        %407 = vmatpush1.msra.mxu0 0.0
        %408 = vmatprep.subr.mxu0 0.0
        %409 = vmatpush1.msra.mxu0 0.0
        %410 = vmatprep.subr.mxu0 0.0
        %411 = vmatpush1.msra.mxu0 0.0
        %412 = vmatprep.subr.mxu0 0.0
        %413 = vmatpush1.msra.mxu0 0.0
        %414 = vmatprep.subr.mxu0 0.0
        %415 = vmatpush1.msra.mxu0 0.0
        %416 = vmatprep.subr.mxu0 0.0
        %417 = vmatpush1.msra.mxu0 0.0
        %418 = vmatprep.mubr.f32.mxu0 0.0
        %419 = vmatmul.mubr.f32.gmra.mrb[0].mxu0 %v352
        %v420 = vpop.f32.mrb[0].mxu0
        %v421 = vadd.f32 0.0, %v420
        %v422 = vpop.f32.mrb[0].mxu0
        %423 = vdwg.mxu0
        %v424 = vadd.f32 %v348, %v421
        %425 = vst [vmem:[#allocation2] sm:$0xff] %v424
        // Predicated region
        $region41: #{graph_convolution.1} parent=35 // pred_check
          %p426 = pneg %p264
        $region42: #{graph_convolution.1} parent=35 // pred_check_branch
          %428 = sbr.rel (%p426) target = $region44
        $region43: #{graph_convolution.1} parent=35 // pred_region
          %v429 = vld [vmem:[#allocation2] sm:$0xff]
          %v430 = vld [vmem:[%s3] sm:$0x1]
          %v432 = vlaneseq
          %v433 = vshrl.u32 %v432, 7
          %v434 = vsub.s32 0, %v433
          %v435 = vrot.slane %v430, %v434
          %v437 = vadd.f32 %v429, %v435
          %438 = vst [vmem:[%s246] sm:$0xff] %v437
        $region44: #{graph_convolution.1} parent=35 // pred_fallthru
          _
        %s439 = sand.u32 %s147, 1
        %s440 = scalar_lea.sflag [#allocation4], %s439
        %s441 = sand.u32 %s147, 1
        %s442 = smul.addr %s441, 8
        %s443 = scalar_lea.vmem [#allocation3], %s442
        // Predicated region
        $region45: #{graph_convolution.1} parent=35 // pred_check
          %p444 = pneg %p157
        $region46: #{graph_convolution.1} parent=35 // pred_check_branch
          %446 = sbr.rel (%p444) target = $region48
        $region47: #{graph_convolution.1} parent=35 // pred_region
          %s448 = ssub.s32 128, 128
          %449 = vsyncadd %s440, %s448
          %s450 = sadd.s32 %s24, %s23
          %s451 = smul.addr %s450, 128
          %s452 = scalar_lea.hbm %s4, %s451
          %s454 = sshll.u32 %s443, 4
          %s455 = int_to_ptr.vmem [resolvable:$true] %s454
          %457 = dma.vmem_to_hbm [thread:$0]  %s455, 128, %s452, %s440
        $region48: #{graph_convolution.1} parent=35 // pred_fallthru
          _
      $region36: #{graph_convolution.1} parent=5 // pred_fallthru
        _
      %p458 = scmp.le.s32.totalorder 2, %s13
      // Predicated region
      $region49: #{graph_convolution.1} parent=5 // pred_check
        %p459 = pneg %p458
      $region50: #{graph_convolution.1} parent=5 // pred_check_branch
        %461 = sbr.rel (%p459) target = $region52
      $region51: #{graph_convolution.1} parent=5 // pred_region
        %s462 = ssub.s32 %s13, 2
        // Predicated region
        $region53: #{graph_convolution.1} parent=51 // pred_check
          %p463 = pneg %p163
        $region54: #{graph_convolution.1} parent=51 // pred_check_branch
          %465 = sbr.rel (%p463) target = $region56
        $region55: #{graph_convolution.1} parent=51 // pred_region
          %s466 = sand.u32 %s148, 1
          %s467 = scalar_lea.sflag [#allocation4], %s466
          %s468 = sand.u32 %s148, 1
          %s469 = smul.addr %s468, 8
          %s470 = scalar_lea.vmem [#allocation3], %s469
          %471 = dma.done %s467, 128
        $region56: #{graph_convolution.1} parent=51 // pred_fallthru
          _
      $region52: #{graph_convolution.1} parent=5 // pred_fallthru
        _
    $region6: #{graph_convolution.1} parent=1 // loop_footer
      %s17 = sadd.s32 1, %s13
    $region7: #{graph_convolution.1} parent=1 // loop_footer_branch
      %12 = sbr.rel target = $region3
    $region8: #{graph_convolution.1} parent=1 // loop_exit
      _
    %472 = vsyncpa [#allocation4], 1
    %s473 = scalar_lea.sflag [#allocation4], 1
    %474 = vsyncpa %s473, 1

</llo_original>
